<compile_context>
chip_gen: v7x
topology: tpu7x:2x2x1
jax: 0.10.0
libtpu: 0.0.40
codegen_flags: <defaults>
</compile_context>

<pallas_src>
import math

import jax
import jax.numpy as jnp
from jax import lax
from jax.experimental import pallas as pl
from jax.experimental.pallas import tpu as pltpu

IN_SHAPE = 8      # LunarLander-v2 observation dim
OUT_SHAPE = 4     # LunarLander-v2 action count
H1, H2, H3 = 64, 48, 32

# Row layout of the packed parameter blob (sublane-aligned row offsets).
_W1_R = (0, H1)                                     # rows   0: 64, cols 0:8  (+ b1 at col 8)
_W2_R = (H1, H1 + H2)                               # rows  64:112, cols 0:64 (+ b2 at col 64)
_W3_R = (H1 + H2, H1 + H2 + H3)                     # rows 112:144, cols 0:48
_W4_R = (H1 + H2 + H3, H1 + H2 + H3 + OUT_SHAPE)    # rows 144:148, cols 0:32
P_ROWS = ((_W4_R[1] + 7) // 8) * 8                  # 152 (sublane multiple)
P_COLS = 128                                        # one lane tile

SUB = 128                                           # in-register sub-block (lanes)
MAX_TB = 2048                                       # batch tile (rows), multiple of 128


def actor_kernel(x_ref, p_ref, o_ref):
    # Parameter slices (static, sublane-aligned rows; loaded once per tile,
    # hoisted out of the inner loop).
    w1 = p_ref[_W1_R[0]:_W1_R[1], 0:IN_SHAPE]                # (64, 8)
    b1 = p_ref[_W1_R[0]:_W1_R[1], IN_SHAPE:IN_SHAPE + 1]     # (64, 1)
    w2 = p_ref[_W2_R[0]:_W2_R[1], 0:H1]                      # (48, 64)
    b2 = p_ref[_W2_R[0]:_W2_R[1], H1:H1 + 1]                 # (48, 1)
    w3 = p_ref[_W3_R[0]:_W3_R[1], 0:H2]                      # (32, 48)
    w4 = p_ref[_W4_R[0]:_W4_R[1], 0:H3]                      # (4, 32)

    n_sub = x_ref.shape[0] // SUB                            # static trip count

    def body(j, carry):
        r0 = pl.multiple_of(j * SUB, SUB)
        xs = x_ref[pl.ds(r0, SUB), :]                        # (128, 8)

        # Layer 1: contract w1 dim 1 with xs dim 1 -> (64, 128); batch stays
        # on the 128-lane axis for all intermediates (fully packed vregs).
        h = jnp.tanh(
            lax.dot_general(w1, xs, (((1,), (1,)), ((), ())),
                            preferred_element_type=jnp.float32) + b1)
        h = jnp.tanh(jnp.dot(w2, h, preferred_element_type=jnp.float32) + b2)
        h = jnp.tanh(jnp.dot(w3, h, preferred_element_type=jnp.float32))
        logits = jnp.dot(w4, h, preferred_element_type=jnp.float32)   # (4, 128)

        # Softmax over the action axis (axis 0 in this transposed layout).
        m = jnp.max(logits, axis=0, keepdims=True)
        e = jnp.exp(logits - m)
        s = jnp.sum(e, axis=0, keepdims=True)
        probs = e * pl.reciprocal(s, approx=False)                     # (4, 128)

        # Tiny XLU transpose -> natural (128, 4) rows; stored directly into
        # the lane-natural output block (no wrapper transpose/slice passes).
        o_ref[pl.ds(r0, SUB), :] = probs.T
        return carry

    lax.fori_loop(0, n_sub, body, 0, unroll=True)


def _round_up(n, m):
    return ((n + m - 1) // m) * m


def _choose_tile(B):
    bp128 = _round_up(B, SUB)
    if bp128 >= 2 * SUB:
        # Keep at least two grid steps so v7x's two TensorCores both get work
        # via the "parallel" batch axis (no-op on single-TC v5e/v6e).
        tb = min(MAX_TB, _round_up((bp128 + 1) // 2, SUB))
    else:
        tb = bp128
    bp = _round_up(B, tb)
    return tb, bp


def actor_forward(x, packed_params):
    """x: (B, 8). Returns (B, 4) softmax action probabilities."""
    B = x.shape[0]
    tb, bp = _choose_tile(B)
    grid = (bp // tb,)

    x = x.astype(jnp.float32)
    if bp != B:
        # Cheap 1-D zero pad (no transpose); padded rows produce a harmless
        # uniform distribution that is sliced off below.
        x = jnp.pad(x, ((0, bp - B), (0, 0)))

    cost = pl.CostEstimate(
        flops=2 * bp * (IN_SHAPE * H1 + H1 * H2 + H2 * H3 + H3 * OUT_SHAPE),
        transcendentals=bp * (H1 + H2 + H3 + OUT_SHAPE),
        bytes_accessed=4 * bp * (IN_SHAPE + OUT_SHAPE) + 4 * P_ROWS * P_COLS)

    out = pl.pallas_call(
        actor_kernel,
        out_shape=jax.ShapeDtypeStruct((bp, OUT_SHAPE), jnp.float32),
        grid=grid,
        in_specs=[
            # Natural (tb, 8) input block: last dim equals the full array dim,
            # so the (8, 128) rule is satisfied without padding lanes.
            pl.BlockSpec((tb, IN_SHAPE), lambda i: (i, 0)),
            # Resident packed-parameter block (constant index -> fetched once).
            # TODO(synk): pipeline_mode=pl.Buffered(1) would drop the unused
            # second pipeline buffer; omitted for maximum lowering portability.
            pl.BlockSpec((P_ROWS, P_COLS), lambda i: (0, 0)),
        ],
        out_specs=pl.BlockSpec((tb, OUT_SHAPE), lambda i: (i, 0)),
        compiler_params=pltpu.CompilerParams(
            dimension_semantics=("parallel",)),
        cost_estimate=cost,
    )(x, packed_params)

    return out if bp == B else out[:B]


def xavier_uniform(key, out_dim, in_dim, gain):
    # Matches torch.nn.init.xavier_uniform_ on an (out_dim, in_dim) weight.
    bound = gain * math.sqrt(6.0 / (in_dim + out_dim))
    return jax.random.uniform(
        key, (out_dim, in_dim), dtype=jnp.float32, minval=-bound, maxval=bound)


def init_params(key):
    gain = 1.0 / math.sqrt(2.0)
    k1, k2, k3, k4 = jax.random.split(key, 4)
    w1 = xavier_uniform(k1, H1, IN_SHAPE, gain)
    b1 = jnp.zeros((H1,), jnp.float32)
    w2 = xavier_uniform(k2, H2, H1, gain)
    b2 = jnp.zeros((H2,), jnp.float32)
    w3 = xavier_uniform(k3, H3, H2, gain)          # no bias
    w4 = xavier_uniform(k4, OUT_SHAPE, H3, gain)   # no bias
    return w1, b1, w2, b2, w3, w4


def pack_params(params):
    w1, b1, w2, b2, w3, w4 = params
    blob = jnp.zeros((P_ROWS, P_COLS), jnp.float32)
    blob = blob.at[_W1_R[0]:_W1_R[1], 0:IN_SHAPE].set(w1)
    blob = blob.at[_W1_R[0]:_W1_R[1], IN_SHAPE:IN_SHAPE + 1].set(b1[:, None])
    blob = blob.at[_W2_R[0]:_W2_R[1], 0:H1].set(w2)
    blob = blob.at[_W2_R[0]:_W2_R[1], H1:H1 + 1].set(b2[:, None])
    blob = blob.at[_W3_R[0]:_W3_R[1], 0:H2].set(w3)
    blob = blob.at[_W4_R[0]:_W4_R[1], 0:H3].set(w4)
    return blob


def reference_forward(x, params):
    w1, b1, w2, b2, w3, w4 = params
    x = x.astype(jnp.float32)
    h = jnp.tanh(x @ w1.T + b1)
    h = jnp.tanh(h @ w2.T + b2)
    h = jnp.tanh(h @ w3.T)
    return jax.nn.softmax(h @ w4.T, axis=-1)


if __name__ == "__main__":
    key = jax.random.PRNGKey(0)
    kx, kx2, kp = jax.random.split(key, 3)

    params = init_params(kp)
    packed = pack_params(params)

    # Small batch (matches the module's typical per-step use): one grid step,
    # single pallas_call, cheap pad/slice only.
    B = 2
    x = jax.random.normal(kx, (B, IN_SHAPE), dtype=jnp.float32)
    out = jax.block_until_ready(actor_forward(x, packed))
    ref = reference_forward(x, params)
    assert out.shape == (B, OUT_SHAPE)
    assert jnp.allclose(out, ref, atol=1e-5, rtol=1e-5)
    assert jnp.allclose(jnp.sum(out, axis=-1), 1.0, atol=1e-5)

    # Larger batch: exercises batch tiling (grid = 2), padding, the unrolled
    # 128-lane inner loop, and the parallel grid axis.
    B2 = 1000
    x2 = jax.random.normal(kx2, (B2, IN_SHAPE), dtype=jnp.float32)
    out2 = jax.block_until_ready(actor_forward(x2, packed))
    ref2 = reference_forward(x2, params)
    assert out2.shape == (B2, OUT_SHAPE)
    assert jnp.allclose(out2, ref2, atol=1e-5, rtol=1e-5)

    print("KERNEL_OK")
</pallas_src>

<mosaic_0001>
module attributes {stable_mosaic.version = 11 : i64} {
  func.func @actor_kernel(%arg0: i32, %arg1: memref<128x8xf32, #tpu.memory_space<vmem>>, %arg2: memref<152x128xf32, #tpu.memory_space<vmem>>, %arg3: memref<128x4xf32, #tpu.memory_space<vmem>>) attributes {dimension_semantics = [#tpu.dimension_semantics<parallel>], iteration_bounds = array<i64: 1>, scalar_prefetch = 0 : i64, scratch_operands = 0 : i64, tpu.core_type = #tpu.core_type<tc>, window_params = [{transform_indices = @transform_0, window_bounds = array<i64: 128, 8>}, {pipeline_mode = #tpu.pipeline_mode<synchronous>, transform_indices = @transform_1, window_bounds = array<i64: 152, 128>}, {transform_indices = @transform_2, window_bounds = array<i64: 128, 4>}]} {
    %c0 = arith.constant 0 : index
    %c0_0 = arith.constant 0 : index
    %0 = vector.load %arg2[%c0, %c0_0] : memref<152x128xf32, #tpu.memory_space<vmem>>, vector<64x8xf32>
    %c0_1 = arith.constant 0 : index
    %c8 = arith.constant 8 : index
    %1 = vector.load %arg2[%c0_1, %c8] : memref<152x128xf32, #tpu.memory_space<vmem>>, vector<64x1xf32>
    %c64 = arith.constant 64 : index
    %c0_2 = arith.constant 0 : index
    %2 = vector.load %arg2[%c64, %c0_2] : memref<152x128xf32, #tpu.memory_space<vmem>>, vector<48x64xf32>
    %c64_3 = arith.constant 64 : index
    %c64_4 = arith.constant 64 : index
    %3 = vector.load %arg2[%c64_3, %c64_4] : memref<152x128xf32, #tpu.memory_space<vmem>>, vector<48x1xf32>
    %c112 = arith.constant 112 : index
    %c0_5 = arith.constant 0 : index
    %4 = vector.load %arg2[%c112, %c0_5] : memref<152x128xf32, #tpu.memory_space<vmem>>, vector<32x48xf32>
    %c144 = arith.constant 144 : index
    %c0_6 = arith.constant 0 : index
    %5 = vector.load %arg2[%c144, %c0_6] : memref<152x128xf32, #tpu.memory_space<vmem>>, vector<4x32xf32>
    %c0_i32 = arith.constant 0 : i32
    %c128_i32 = arith.constant 128 : i32
    %6 = arith.muli %c0_i32, %c128_i32 : i32
    %7 = tpu.assume_multiple %6, 128 : i32
    %8 = arith.index_cast %7 : i32 to index
    %c0_7 = arith.constant 0 : index
    %9 = vector.load %arg1[%8, %c0_7] : memref<128x8xf32, #tpu.memory_space<vmem>>, vector<128x8xf32>
    %cst = arith.constant dense<0.000000e+00> : vector<64x128xf32>
    %10 = tpu.matmul %0, %9, %cst {dimension_numbers = #tpu.dot_dimension_numbers<[1], [1], [0], [0], [0, 0, 1, 0], [], []>} : vector<64x8xf32>, vector<128x8xf32>, vector<64x128xf32> -> vector<64x128xf32>
    %11 = vector.broadcast %1 : vector<64x1xf32> to vector<64x128xf32>
    %12 = arith.addf %10, %11 : vector<64x128xf32>
    %13 = math.tanh %12 : vector<64x128xf32>
    %cst_8 = arith.constant dense<0.000000e+00> : vector<48x128xf32>
    %14 = tpu.matmul %2, %13, %cst_8 {dimension_numbers = #tpu.dot_dimension_numbers<[1], [0], [0], [1], [0, 0, 1, 1], [], []>} : vector<48x64xf32>, vector<64x128xf32>, vector<48x128xf32> -> vector<48x128xf32>
    %15 = vector.broadcast %3 : vector<48x1xf32> to vector<48x128xf32>
    %16 = arith.addf %14, %15 : vector<48x128xf32>
    %17 = math.tanh %16 : vector<48x128xf32>
    %cst_9 = arith.constant dense<0.000000e+00> : vector<32x128xf32>
    %18 = tpu.matmul %4, %17, %cst_9 {dimension_numbers = #tpu.dot_dimension_numbers<[1], [0], [0], [1], [0, 0, 1, 1], [], []>} : vector<32x48xf32>, vector<48x128xf32>, vector<32x128xf32> -> vector<32x128xf32>
    %19 = math.tanh %18 : vector<32x128xf32>
    %cst_10 = arith.constant dense<0.000000e+00> : vector<4x128xf32>
    %20 = tpu.matmul %5, %19, %cst_10 {dimension_numbers = #tpu.dot_dimension_numbers<[1], [0], [0], [1], [0, 0, 1, 1], [], []>} : vector<4x32xf32>, vector<32x128xf32>, vector<4x128xf32> -> vector<4x128xf32>
    %cst_11 = arith.constant dense<0xFF800000> : vector<128xf32>
    %21 = vector.multi_reduction <maximumf>, %20, %cst_11 [0] : vector<4x128xf32> to vector<128xf32>
    %22 = vector.shape_cast %21 : vector<128xf32> to vector<1x128xf32>
    %23 = vector.broadcast %22 : vector<1x128xf32> to vector<4x128xf32>
    %24 = arith.subf %20, %23 : vector<4x128xf32>
    %25 = math.exp %24 : vector<4x128xf32>
    %cst_12 = arith.constant dense<0.000000e+00> : vector<128xf32>
    %26 = vector.multi_reduction <add>, %25, %cst_12 [0] : vector<4x128xf32> to vector<128xf32>
    %27 = vector.shape_cast %26 : vector<128xf32> to vector<1x128xf32>
    %28 = tpu.reciprocal %27 : vector<1x128xf32> -> vector<1x128xf32>
    %29 = vector.broadcast %28 : vector<1x128xf32> to vector<4x128xf32>
    %30 = arith.mulf %25, %29 : vector<4x128xf32>
    %31 = tpu.transpose %30, [1, 0] : vector<4x128xf32> -> vector<128x4xf32>
    %32 = arith.index_cast %7 : i32 to index
    %c0_13 = arith.constant 0 : index
    %33 = vector.load %arg3[%32, %c0_13] : memref<128x4xf32, #tpu.memory_space<vmem>>, vector<128x4xf32>
    tpu.vector_store %arg3[%32, %c0_13], %31 {strides = array<i32>} : memref<128x4xf32, #tpu.memory_space<vmem>>, vector<128x4xf32>,
    %c1_i32 = arith.constant 1 : i32
    return
  }
  func.func @transform_0(%arg0: i32) -> (i32, i32) {
    %c0_i32 = arith.constant 0 : i32
    %c0_i32_0 = arith.constant 0 : i32
    return %arg0, %c0_i32 : i32, i32
  }
  func.func @transform_1(%arg0: i32) -> (i32, i32) {
    %c0_i32 = arith.constant 0 : i32
    %c0_i32_0 = arith.constant 0 : i32
    %c0_i32_1 = arith.constant 0 : i32
    return %c0_i32, %c0_i32_0 : i32, i32
  }
  func.func @transform_2(%arg0: i32) -> (i32, i32) {
    %c0_i32 = arith.constant 0 : i32
    %c0_i32_0 = arith.constant 0 : i32
    return %arg0, %c0_i32 : i32, i32
  }
}

</mosaic_0001>

<llo_original>
// kernel: tpu_custom_call.1
$region0: #{tpu_custom_call.1}
  #allocation0 [shape = 'u32[]', space=smem, size = 0x4, offset = 0x4, fixed_abs, tag = 'smem constant byte address 0x4 - core index']
  #allocation1 [shape = 'u32[144,128]{1,0:T(1,128)}', space=vmem, size = 0x12000, scoped, tag = 'internal scratch']
  %s0 = inlined_call_operand.vmem [shape: f32[128,8], index: 0, kind: input, shape index: {}]
  %s1 = inlined_call_operand.hbm [shape: f32[152,128], index: 1, kind: input, shape index: {}]
  %s2 = inlined_call_operand.vmem [shape: f32[128,4], index: 2, kind: output, shape index: {}]
  %s3 = sld [smem:[#allocation0]]
  $region22: #{tpu_custom_call.1} parent=0
    _
  %s5 = ssub.s32 1, %s3
  %s6 = scalar_select 0, %s5, %s3
  $region1: #{tpu_custom_call.1} parent=0
    #allocation2 [shape = 'u8[77824]{0}', space=vmem, size = 0x13000, scoped, tag = 'input window, operand 1, single buffered']
    #allocation3 [shape = 's32[1]{0}', space=sflag, size = 0x4, scoped, tag = 'scoped memory for tpu_custom_call.1']
    %7 = vsyncpa [#allocation3], 0
    // Predicated region
    $region2: #{tpu_custom_call.1} parent=1 // pred_check
      _
    $region3: #{tpu_custom_call.1} parent=1 // pred_check_branch
      %9 = sbr.rel (0) target = $region5
    $region4: #{tpu_custom_call.1} parent=1 // pred_region
      _
    $region5: #{tpu_custom_call.1} parent=1 // pred_fallthru
      _
    // Predicated region
    $region6: #{tpu_custom_call.1} parent=1 // pred_check
      _
    $region7: #{tpu_custom_call.1} parent=1 // pred_check_branch
      %11 = sbr.rel (0) target = $region9
    $region8: #{tpu_custom_call.1} parent=1 // pred_region
      %s13 = ssub.s32 2432, 2432
      %14 = vsyncadd [#allocation3], %s13
      %s15 = sshll.u32 [#allocation2], 4
      %s16 = int_to_ptr.vmem [resolvable:$true] %s15
      %21 = dma.hbm_to_vmem [thread:$0]  %s1, 2432, %s16, [#allocation3], 128, 128, 8
    $region9: #{tpu_custom_call.1} parent=1 // pred_fallthru
      _
    // Predicated region
    $region10: #{tpu_custom_call.1} parent=1 // pred_check
      _
    $region11: #{tpu_custom_call.1} parent=1 // pred_check_branch
      %23 = sbr.rel (0) target = $region13
    $region12: #{tpu_custom_call.1} parent=1 // pred_region
      %24 = dma.done [#allocation3], 2432
    $region13: #{tpu_custom_call.1} parent=1 // pred_fallthru
      _
    %v25 = vld [vmem:[#allocation2] sm:$0xff]
    %v26 = vld [vmem:[#allocation2 + $0x8] sm:$0xff]
    %v27 = vld [vmem:[#allocation2 + $0x10] sm:$0xff]
    %v28 = vld [vmem:[#allocation2 + $0x18] sm:$0xff]
    %v29 = vld [vmem:[#allocation2 + $0x20] sm:$0xff]
    %v30 = vld [vmem:[#allocation2 + $0x28] sm:$0xff]
    %v31 = vld [vmem:[#allocation2 + $0x30] sm:$0xff]
    %v32 = vld [vmem:[#allocation2 + $0x38] sm:$0xff]
    %v33 = vld [vmem:[#allocation2 + $0x40] sm:$0xff]
    %v34 = vld [vmem:[#allocation2 + $0x48] sm:$0xff]
    %v35 = vld [vmem:[#allocation2 + $0x50] sm:$0xff]
    %v36 = vld [vmem:[#allocation2 + $0x58] sm:$0xff]
    %v37 = vld [vmem:[#allocation2 + $0x60] sm:$0xff]
    %v38 = vld [vmem:[#allocation2 + $0x68] sm:$0xff]
    %v39 = vld [vmem:[#allocation2 + $0x70] sm:$0xff]
    %v40 = vld [vmem:[#allocation2 + $0x78] sm:$0xff]
    %v41 = vld [vmem:[#allocation2 + $0x80] sm:$0xff]
    %v42 = vld [vmem:[#allocation2 + $0x88] sm:$0xff]
    %v43 = vld [vmem:[#allocation2 + $0x90] sm:$0xf]
    %v44 = vld [vmem:[%s0] sm:$0xff]
    %v45 = vld [vmem:[%s0 + $0x8] sm:$0xff]
    %v46 = vld [vmem:[%s0 + $0x10] sm:$0xff]
    %v47 = vld [vmem:[%s0 + $0x18] sm:$0xff]
    %v48 = vld [vmem:[%s0 + $0x20] sm:$0xff]
    %v49 = vld [vmem:[%s0 + $0x28] sm:$0xff]
    %v50 = vld [vmem:[%s0 + $0x30] sm:$0xff]
    %v51 = vld [vmem:[%s0 + $0x38] sm:$0xff]
    %v52 = vld [vmem:[%s0 + $0x40] sm:$0xff]
    %v53 = vld [vmem:[%s0 + $0x48] sm:$0xff]
    %v54 = vld [vmem:[%s0 + $0x50] sm:$0xff]
    %v55 = vld [vmem:[%s0 + $0x58] sm:$0xff]
    %v56 = vld [vmem:[%s0 + $0x60] sm:$0xff]
    %v57 = vld [vmem:[%s0 + $0x68] sm:$0xff]
    %v58 = vld [vmem:[%s0 + $0x70] sm:$0xff]
    %v59 = vld [vmem:[%s0 + $0x78] sm:$0xff]
    %61 = vset.pattern.permute.xlu0 8
    %62 = vperm.xlu0 %61, %v25
    %v63 = vpop.permute.xlu0 %62
    %66 = vset.pattern.permute.xlu0 8
    %67 = vperm.xlu0 %66, %v26
    %v68 = vpop.permute.xlu0 %67
    %71 = vset.pattern.permute.xlu0 8
    %72 = vperm.xlu0 %71, %v27
    %v73 = vpop.permute.xlu0 %72
    %76 = vset.pattern.permute.xlu0 8
    %77 = vperm.xlu0 %76, %v28
    %v78 = vpop.permute.xlu0 %77
    %81 = vset.pattern.permute.xlu0 8
    %82 = vperm.xlu0 %81, %v29
    %v83 = vpop.permute.xlu0 %82
    %86 = vset.pattern.permute.xlu0 8
    %87 = vperm.xlu0 %86, %v30
    %v88 = vpop.permute.xlu0 %87
    %91 = vset.pattern.permute.xlu0 8
    %92 = vperm.xlu0 %91, %v31
    %v93 = vpop.permute.xlu0 %92
    %96 = vset.pattern.permute.xlu0 8
    %97 = vperm.xlu0 %96, %v32
    %v98 = vpop.permute.xlu0 %97
    %vm100 = vcmask 64512
    %v101 = vsel %vm100, %v25, 0
    %v103 = vsel %vm100, %v26, 0
    %v105 = vsel %vm100, %v27, 0
    %v107 = vsel %vm100, %v28, 0
    %v109 = vsel %vm100, %v29, 0
    %v111 = vsel %vm100, %v30, 0
    %v113 = vsel %vm100, %v31, 0
    %v115 = vsel %vm100, %v32, 0
    %v118 = vsel %vm100, %v44, 0
    %v121 = vsel %vm100, %v45, 0
    %v124 = vsel %vm100, %v46, 0
    %v127 = vsel %vm100, %v47, 0
    %v130 = vsel %vm100, %v48, 0
    %v133 = vsel %vm100, %v49, 0
    %v136 = vsel %vm100, %v50, 0
    %v139 = vsel %vm100, %v51, 0
    %v142 = vsel %vm100, %v52, 0
    %v145 = vsel %vm100, %v53, 0
    %v148 = vsel %vm100, %v54, 0
    %v151 = vsel %vm100, %v55, 0
    %v154 = vsel %vm100, %v56, 0
    %v157 = vsel %vm100, %v57, 0
    %v160 = vsel %vm100, %v58, 0
    %v163 = vsel %vm100, %v59, 0
    %165 = vmatprep.subr.mxu0 0.0
    %166 = vmatpush1.xpose.msra.mxu0 %v118
    %167 = vmatprep.subr.mxu0 0.0
    %168 = vmatpush1.xpose.msra.mxu0 %v121
    %169 = vmatprep.subr.mxu0 0.0
    %170 = vmatpush1.xpose.msra.mxu0 %v124
    %171 = vmatprep.subr.mxu0 0.0
    %172 = vmatpush1.xpose.msra.mxu0 %v127
    %173 = vmatprep.subr.mxu0 0.0
    %174 = vmatpush1.xpose.msra.mxu0 %v130
    %175 = vmatprep.subr.mxu0 0.0
    %176 = vmatpush1.xpose.msra.mxu0 %v133
    %177 = vmatprep.subr.mxu0 0.0
    %178 = vmatpush1.xpose.msra.mxu0 %v136
    %179 = vmatprep.subr.mxu0 0.0
    %180 = vmatpush1.xpose.msra.mxu0 %v139
    %181 = vmatprep.subr.mxu0 0.0
    %182 = vmatpush1.xpose.msra.mxu0 %v142
    %183 = vmatprep.subr.mxu0 0.0
    %184 = vmatpush1.xpose.msra.mxu0 %v145
    %185 = vmatprep.subr.mxu0 0.0
    %186 = vmatpush1.xpose.msra.mxu0 %v148
    %187 = vmatprep.subr.mxu0 0.0
    %188 = vmatpush1.xpose.msra.mxu0 %v151
    %189 = vmatprep.subr.mxu0 0.0
    %190 = vmatpush1.xpose.msra.mxu0 %v154
    %191 = vmatprep.subr.mxu0 0.0
    %192 = vmatpush1.xpose.msra.mxu0 %v157
    %193 = vmatprep.subr.mxu0 0.0
    %194 = vmatpush1.xpose.msra.mxu0 %v160
    %195 = vmatprep.subr.mxu0 0.0
    %196 = vmatpush1.xpose.msra.mxu0 %v163
    %197 = vmatprep.subr.mxu0 0.0
    %198 = vmatpush1.xpose.msra.mxu0 0.0
    %199 = vmatprep.subr.mxu0 0.0
    %200 = vmatpush1.xpose.msra.mxu0 0.0
    %201 = vmatprep.subr.mxu0 0.0
    %202 = vmatpush1.xpose.msra.mxu0 0.0
    %203 = vmatprep.subr.mxu0 0.0
    %204 = vmatpush1.xpose.msra.mxu0 0.0
    %205 = vmatprep.subr.mxu0 0.0
    %206 = vmatpush1.xpose.msra.mxu0 0.0
    %207 = vmatprep.subr.mxu0 0.0
    %208 = vmatpush1.xpose.msra.mxu0 0.0
    %209 = vmatprep.subr.mxu0 0.0
    %210 = vmatpush1.xpose.msra.mxu0 0.0
    %211 = vmatprep.subr.mxu0 0.0
    %212 = vmatpush1.xpose.msra.mxu0 0.0
    %213 = vmatprep.subr.mxu0 0.0
    %214 = vmatpush1.xpose.msra.mxu0 0.0
    %215 = vmatprep.subr.mxu0 0.0
    %216 = vmatpush1.xpose.msra.mxu0 0.0
    %217 = vmatprep.subr.mxu0 0.0
    %218 = vmatpush1.xpose.msra.mxu0 0.0
    %219 = vmatprep.subr.mxu0 0.0
    %220 = vmatpush1.xpose.msra.mxu0 0.0
    %221 = vmatprep.subr.mxu0 0.0
    %222 = vmatpush1.xpose.msra.mxu0 0.0
    %223 = vmatprep.subr.mxu0 0.0
    %224 = vmatpush1.xpose.msra.mxu0 0.0
    %225 = vmatprep.subr.mxu0 0.0
    %226 = vmatpush1.xpose.msra.mxu0 0.0
    %227 = vmatprep.subr.mxu0 0.0
    %228 = vmatpush1.xpose.msra.mxu0 0.0
    %229 = vmatprep.mubr.f32.mxu0 0.0
    %230 = vmatmul.mubr.f32.gmra.mrb[0].mxu0 %v101
    %v231 = vpop.f32.mrb[0].mxu0
    %v232 = vadd.f32 %v63, %v231
    %v233 = vpop.f32.mrb[0].mxu0
    %234 = vmatprep.mubr.f32.mxu0 0.0
    %235 = vmatmul.mubr.f32.gmra.mrb[0].mxu0 %v103
    %v236 = vpop.f32.mrb[0].mxu0
    %v237 = vadd.f32 %v68, %v236
    %v238 = vpop.f32.mrb[0].mxu0
    %239 = vmatprep.mubr.f32.mxu0 0.0
    %240 = vmatmul.mubr.f32.gmra.mrb[0].mxu0 %v105
    %v241 = vpop.f32.mrb[0].mxu0
    %v242 = vadd.f32 %v73, %v241
    %v243 = vpop.f32.mrb[0].mxu0
    %244 = vmatprep.mubr.f32.mxu0 0.0
    %245 = vmatmul.mubr.f32.gmra.mrb[0].mxu0 %v107
    %v246 = vpop.f32.mrb[0].mxu0
    %v247 = vadd.f32 %v78, %v246
    %v248 = vpop.f32.mrb[0].mxu0
    %249 = vmatprep.mubr.f32.mxu0 0.0
    %250 = vmatmul.mubr.f32.gmra.mrb[0].mxu0 %v109
    %v251 = vpop.f32.mrb[0].mxu0
    %v252 = vadd.f32 %v83, %v251
    %v253 = vpop.f32.mrb[0].mxu0
    %254 = vmatprep.mubr.f32.mxu0 0.0
    %255 = vmatmul.mubr.f32.gmra.mrb[0].mxu0 %v111
    %v256 = vpop.f32.mrb[0].mxu0
    %v257 = vadd.f32 %v88, %v256
    %v258 = vpop.f32.mrb[0].mxu0
    %259 = vmatprep.mubr.f32.mxu0 0.0
    %260 = vmatmul.mubr.f32.gmra.mrb[0].mxu0 %v113
    %v261 = vpop.f32.mrb[0].mxu0
    %v262 = vadd.f32 %v93, %v261
    %v263 = vpop.f32.mrb[0].mxu0
    %264 = vmatprep.mubr.f32.mxu0 0.0
    %265 = vmatmul.mubr.f32.gmra.mrb[0].mxu0 %v115
    %v266 = vpop.f32.mrb[0].mxu0
    %v267 = vadd.f32 %v98, %v266
    %v268 = vpop.f32.mrb[0].mxu0
    %269 = vdwg.mxu0
    %v270 = vtanh.pop %v232
    %v271 = vtanh.pop %v237
    %v272 = vtanh.pop %v242
    %v273 = vtanh.pop %v247
    %v274 = vtanh.pop %v252
    %v275 = vtanh.pop %v257
    %v276 = vtanh.pop %v262
    %v277 = vtanh.pop %v267
    %279 = vset.pattern.permute.xlu0 64
    %280 = vperm.xlu0 %279, %v33
    %v281 = vpop.permute.xlu0 %280
    %284 = vset.pattern.permute.xlu0 64
    %285 = vperm.xlu0 %284, %v34
    %v286 = vpop.permute.xlu0 %285
    %289 = vset.pattern.permute.xlu0 64
    %290 = vperm.xlu0 %289, %v35
    %v291 = vpop.permute.xlu0 %290
    %294 = vset.pattern.permute.xlu0 64
    %295 = vperm.xlu0 %294, %v36
    %v296 = vpop.permute.xlu0 %295
    %299 = vset.pattern.permute.xlu0 64
    %300 = vperm.xlu0 %299, %v37
    %v301 = vpop.permute.xlu0 %300
    %304 = vset.pattern.permute.xlu0 64
    %305 = vperm.xlu0 %304, %v38
    %v306 = vpop.permute.xlu0 %305
    %vm308 = vcmask 523264
    %v309 = vsel %vm308, %v33, 0
    %v311 = vsel %vm308, %v34, 0
    %v313 = vsel %vm308, %v35, 0
    %v315 = vsel %vm308, %v36, 0
    %v317 = vsel %vm308, %v37, 0
    %v319 = vsel %vm308, %v38, 0
    %321 = vmatprep.subr.mxu0 0.0
    %322 = vmatpush1.msra.mxu0 %v270
    %323 = vmatprep.subr.mxu0 0.0
    %324 = vmatpush1.msra.mxu0 %v271
    %325 = vmatprep.subr.mxu0 0.0
    %326 = vmatpush1.msra.mxu0 %v272
    %327 = vmatprep.subr.mxu0 0.0
    %328 = vmatpush1.msra.mxu0 %v273
    %329 = vmatprep.subr.mxu0 0.0
    %330 = vmatpush1.msra.mxu0 %v274
    %331 = vmatprep.subr.mxu0 0.0
    %332 = vmatpush1.msra.mxu0 %v275
    %333 = vmatprep.subr.mxu0 0.0
    %334 = vmatpush1.msra.mxu0 %v276
    %335 = vmatprep.subr.mxu0 0.0
    %336 = vmatpush1.msra.mxu0 %v277
    %337 = vmatprep.subr.mxu0 0.0
    %338 = vmatpush1.msra.mxu0 0.0
    %339 = vmatprep.subr.mxu0 0.0
    %340 = vmatpush1.msra.mxu0 0.0
    %341 = vmatprep.subr.mxu0 0.0
    %342 = vmatpush1.msra.mxu0 0.0
    %343 = vmatprep.subr.mxu0 0.0
    %344 = vmatpush1.msra.mxu0 0.0
    %345 = vmatprep.subr.mxu0 0.0
    %346 = vmatpush1.msra.mxu0 0.0
    %347 = vmatprep.subr.mxu0 0.0
    %348 = vmatpush1.msra.mxu0 0.0
    %349 = vmatprep.subr.mxu0 0.0
    %350 = vmatpush1.msra.mxu0 0.0
    %351 = vmatprep.subr.mxu0 0.0
    %352 = vmatpush1.msra.mxu0 0.0
    %353 = vmatprep.subr.mxu0 0.0
    %354 = vmatpush1.msra.mxu0 0.0
    %355 = vmatprep.subr.mxu0 0.0
    %356 = vmatpush1.msra.mxu0 0.0
    %357 = vmatprep.subr.mxu0 0.0
    %358 = vmatpush1.msra.mxu0 0.0
    %359 = vmatprep.subr.mxu0 0.0
    %360 = vmatpush1.msra.mxu0 0.0
    %361 = vmatprep.subr.mxu0 0.0
    %362 = vmatpush1.msra.mxu0 0.0
    %363 = vmatprep.subr.mxu0 0.0
    %364 = vmatpush1.msra.mxu0 0.0
    %365 = vmatprep.subr.mxu0 0.0
    %366 = vmatpush1.msra.mxu0 0.0
    %367 = vmatprep.subr.mxu0 0.0
    %368 = vmatpush1.msra.mxu0 0.0
    %369 = vmatprep.subr.mxu0 0.0
    %370 = vmatpush1.msra.mxu0 0.0
    %371 = vmatprep.subr.mxu0 0.0
    %372 = vmatpush1.msra.mxu0 0.0
    %373 = vmatprep.subr.mxu0 0.0
    %374 = vmatpush1.msra.mxu0 0.0
    %375 = vmatprep.subr.mxu0 0.0
    %376 = vmatpush1.msra.mxu0 0.0
    %377 = vmatprep.subr.mxu0 0.0
    %378 = vmatpush1.msra.mxu0 0.0
    %379 = vmatprep.subr.mxu0 0.0
    %380 = vmatpush1.msra.mxu0 0.0
    %381 = vmatprep.subr.mxu0 0.0
    %382 = vmatpush1.msra.mxu0 0.0
    %383 = vmatprep.subr.mxu0 0.0
    %384 = vmatpush1.msra.mxu0 0.0
    %385 = vmatprep.mubr.f32.mxu0 0.0
    %386 = vmatmul.mubr.f32.gmra.mrb[0].mxu0 %v309
    %v387 = vpop.f32.mrb[0].mxu0
    %v388 = vadd.f32 %v281, %v387
    %v389 = vpop.f32.mrb[0].mxu0
    %390 = vmatprep.mubr.f32.mxu0 0.0
    %391 = vmatmul.mubr.f32.gmra.mrb[0].mxu0 %v311
    %v392 = vpop.f32.mrb[0].mxu0
    %v393 = vadd.f32 %v286, %v392
    %v394 = vpop.f32.mrb[0].mxu0
    %395 = vmatprep.mubr.f32.mxu0 0.0
    %396 = vmatmul.mubr.f32.gmra.mrb[0].mxu0 %v313
    %v397 = vpop.f32.mrb[0].mxu0
    %v398 = vadd.f32 %v291, %v397
    %v399 = vpop.f32.mrb[0].mxu0
    %400 = vmatprep.mubr.f32.mxu0 0.0
    %401 = vmatmul.mubr.f32.gmra.mrb[0].mxu0 %v315
    %v402 = vpop.f32.mrb[0].mxu0
    %v403 = vadd.f32 %v296, %v402
    %v404 = vpop.f32.mrb[0].mxu0
    %405 = vmatprep.mubr.f32.mxu0 0.0
    %406 = vmatmul.mubr.f32.gmra.mrb[0].mxu0 %v317
    %v407 = vpop.f32.mrb[0].mxu0
    %v408 = vadd.f32 %v301, %v407
    %v409 = vpop.f32.mrb[0].mxu0
    %410 = vmatprep.mubr.f32.mxu0 0.0
    %411 = vmatmul.mubr.f32.gmra.mrb[0].mxu0 %v319
    %v412 = vpop.f32.mrb[0].mxu0
    %v413 = vadd.f32 %v306, %v412
    %v414 = vpop.f32.mrb[0].mxu0
    %415 = vdwg.mxu0
    %v416 = vtanh.pop %v388
    %v417 = vtanh.pop %v393
    %v418 = vtanh.pop %v398
    %v419 = vtanh.pop %v403
    %v420 = vtanh.pop %v408
    %v421 = vtanh.pop %v413
    %vm422 = vcmask 392192
    %v424 = vsel %vm422, %v39, 0
    %v427 = vsel %vm422, %v40, 0
    %v430 = vsel %vm422, %v41, 0
    %v433 = vsel %vm422, %v42, 0
    %435 = vmatprep.subr.mxu0 0.0
    %436 = vmatpush1.msra.mxu0 %v416
    %437 = vmatprep.subr.mxu0 0.0
    %438 = vmatpush1.msra.mxu0 %v417
    %439 = vmatprep.subr.mxu0 0.0
    %440 = vmatpush1.msra.mxu0 %v418
    %441 = vmatprep.subr.mxu0 0.0
    %442 = vmatpush1.msra.mxu0 %v419
    %443 = vmatprep.subr.mxu0 0.0
    %444 = vmatpush1.msra.mxu0 %v420
    %445 = vmatprep.subr.mxu0 0.0
    %446 = vmatpush1.msra.mxu0 %v421
    %447 = vmatprep.subr.mxu0 0.0
    %448 = vmatpush1.msra.mxu0 0.0
    %449 = vmatprep.subr.mxu0 0.0
    %450 = vmatpush1.msra.mxu0 0.0
    %451 = vmatprep.subr.mxu0 0.0
    %452 = vmatpush1.msra.mxu0 0.0
    %453 = vmatprep.subr.mxu0 0.0
    %454 = vmatpush1.msra.mxu0 0.0
    %455 = vmatprep.subr.mxu0 0.0
    %456 = vmatpush1.msra.mxu0 0.0
    %457 = vmatprep.subr.mxu0 0.0
    %458 = vmatpush1.msra.mxu0 0.0
    %459 = vmatprep.subr.mxu0 0.0
    %460 = vmatpush1.msra.mxu0 0.0
    %461 = vmatprep.subr.mxu0 0.0
    %462 = vmatpush1.msra.mxu0 0.0
    %463 = vmatprep.subr.mxu0 0.0
    %464 = vmatpush1.msra.mxu0 0.0
    %465 = vmatprep.subr.mxu0 0.0
    %466 = vmatpush1.msra.mxu0 0.0
    %467 = vmatprep.subr.mxu0 0.0
    %468 = vmatpush1.msra.mxu0 0.0
    %469 = vmatprep.subr.mxu0 0.0
    %470 = vmatpush1.msra.mxu0 0.0
    %471 = vmatprep.subr.mxu0 0.0
    %472 = vmatpush1.msra.mxu0 0.0
    %473 = vmatprep.subr.mxu0 0.0
    %474 = vmatpush1.msra.mxu0 0.0
    %475 = vmatprep.subr.mxu0 0.0
    %476 = vmatpush1.msra.mxu0 0.0
    %477 = vmatprep.subr.mxu0 0.0
    %478 = vmatpush1.msra.mxu0 0.0
    %479 = vmatprep.subr.mxu0 0.0
    %480 = vmatpush1.msra.mxu0 0.0
    %481 = vmatprep.subr.mxu0 0.0
    %482 = vmatpush1.msra.mxu0 0.0
    %483 = vmatprep.subr.mxu0 0.0
    %484 = vmatpush1.msra.mxu0 0.0
    %485 = vmatprep.subr.mxu0 0.0
    %486 = vmatpush1.msra.mxu0 0.0
    %487 = vmatprep.subr.mxu0 0.0
    %488 = vmatpush1.msra.mxu0 0.0
    %489 = vmatprep.subr.mxu0 0.0
    %490 = vmatpush1.msra.mxu0 0.0
    %491 = vmatprep.subr.mxu0 0.0
    %492 = vmatpush1.msra.mxu0 0.0
    %493 = vmatprep.subr.mxu0 0.0
    %494 = vmatpush1.msra.mxu0 0.0
    %495 = vmatprep.subr.mxu0 0.0
    %496 = vmatpush1.msra.mxu0 0.0
    %497 = vmatprep.subr.mxu0 0.0
    %498 = vmatpush1.msra.mxu0 0.0
    %499 = vmatprep.mubr.f32.mxu0 0.0
    %500 = vmatmul.mubr.f32.gmra.mrb[0].mxu0 %v424
    %v501 = vpop.f32.mrb[0].mxu0
    %v502 = vadd.f32 0.0, %v501
    %v503 = vpop.f32.mrb[0].mxu0
    %504 = vmatprep.mubr.f32.mxu0 0.0
    %505 = vmatmul.mubr.f32.gmra.mrb[0].mxu0 %v427
    %v506 = vpop.f32.mrb[0].mxu0
    %v507 = vadd.f32 0.0, %v506
    %v508 = vpop.f32.mrb[0].mxu0
    %509 = vmatprep.mubr.f32.mxu0 0.0
    %510 = vmatmul.mubr.f32.gmra.mrb[0].mxu0 %v430
    %v511 = vpop.f32.mrb[0].mxu0
    %v512 = vadd.f32 0.0, %v511
    %v513 = vpop.f32.mrb[0].mxu0
    %514 = vmatprep.mubr.f32.mxu0 0.0
    %515 = vmatmul.mubr.f32.gmra.mrb[0].mxu0 %v433
    %v516 = vpop.f32.mrb[0].mxu0
    %v517 = vadd.f32 0.0, %v516
    %v518 = vpop.f32.mrb[0].mxu0
    %519 = vdwg.mxu0
    %v520 = vtanh.pop %v502
    %v521 = vtanh.pop %v507
    %v522 = vtanh.pop %v512
    %v523 = vtanh.pop %v517
    %vm524 = vcmask 261120
    %v526 = vsel %vm524, %v43, 0
    %528 = vmatprep.subr.mxu0 0.0
    %529 = vmatpush1.msra.mxu0 %v520
    %530 = vmatprep.subr.mxu0 0.0
    %531 = vmatpush1.msra.mxu0 %v521
    %532 = vmatprep.subr.mxu0 0.0
    %533 = vmatpush1.msra.mxu0 %v522
    %534 = vmatprep.subr.mxu0 0.0
    %535 = vmatpush1.msra.mxu0 %v523
    %536 = vmatprep.subr.mxu0 0.0
    %537 = vmatpush1.msra.mxu0 0.0
    %538 = vmatprep.subr.mxu0 0.0
    %539 = vmatpush1.msra.mxu0 0.0
    %540 = vmatprep.subr.mxu0 0.0
    %541 = vmatpush1.msra.mxu0 0.0
    %542 = vmatprep.subr.mxu0 0.0
    %543 = vmatpush1.msra.mxu0 0.0
    %544 = vmatprep.subr.mxu0 0.0
    %545 = vmatpush1.msra.mxu0 0.0
    %546 = vmatprep.subr.mxu0 0.0
    %547 = vmatpush1.msra.mxu0 0.0
    %548 = vmatprep.subr.mxu0 0.0
    %549 = vmatpush1.msra.mxu0 0.0
    %550 = vmatprep.subr.mxu0 0.0
    %551 = vmatpush1.msra.mxu0 0.0
    %552 = vmatprep.subr.mxu0 0.0
    %553 = vmatpush1.msra.mxu0 0.0
    %554 = vmatprep.subr.mxu0 0.0
    %555 = vmatpush1.msra.mxu0 0.0
    %556 = vmatprep.subr.mxu0 0.0
    %557 = vmatpush1.msra.mxu0 0.0
    %558 = vmatprep.subr.mxu0 0.0
    %559 = vmatpush1.msra.mxu0 0.0
    %560 = vmatprep.subr.mxu0 0.0
    %561 = vmatpush1.msra.mxu0 0.0
    %562 = vmatprep.subr.mxu0 0.0
    %563 = vmatpush1.msra.mxu0 0.0
    %564 = vmatprep.subr.mxu0 0.0
    %565 = vmatpush1.msra.mxu0 0.0
    %566 = vmatprep.subr.mxu0 0.0
    %567 = vmatpush1.msra.mxu0 0.0
    %568 = vmatprep.subr.mxu0 0.0
    %569 = vmatpush1.msra.mxu0 0.0
    %570 = vmatprep.subr.mxu0 0.0
    %571 = vmatpush1.msra.mxu0 0.0
    %572 = vmatprep.subr.mxu0 0.0
    %573 = vmatpush1.msra.mxu0 0.0
    %574 = vmatprep.subr.mxu0 0.0
    %575 = vmatpush1.msra.mxu0 0.0
    %576 = vmatprep.subr.mxu0 0.0
    %577 = vmatpush1.msra.mxu0 0.0
    %578 = vmatprep.subr.mxu0 0.0
    %579 = vmatpush1.msra.mxu0 0.0
    %580 = vmatprep.subr.mxu0 0.0
    %581 = vmatpush1.msra.mxu0 0.0
    %582 = vmatprep.subr.mxu0 0.0
    %583 = vmatpush1.msra.mxu0 0.0
    %584 = vmatprep.subr.mxu0 0.0
    %585 = vmatpush1.msra.mxu0 0.0
    %586 = vmatprep.subr.mxu0 0.0
    %587 = vmatpush1.msra.mxu0 0.0
    %588 = vmatprep.subr.mxu0 0.0
    %589 = vmatpush1.msra.mxu0 0.0
    %590 = vmatprep.subr.mxu0 0.0
    %591 = vmatpush1.msra.mxu0 0.0
    %592 = vmatprep.mubr.f32.mxu0 0.0
    %593 = vmatmul.mubr.f32.gmra.mrb[0].mxu0 %v526
    %v594 = vpop.f32.mrb[0].mxu0
    %v595 = vadd.f32 0.0, %v594
    %v596 = vpop.f32.mrb[0].mxu0
    %597 = vdwg.mxu0
    %vm598 = vcmask 1043456
    %v599 = vsel %vm598, %v595, -inf
    %v600 = vrot.slane %v599, 4
    %v601 = vmax.f32 %v599, %v600
    %v602 = vrot.slane %v601, 2
    %v603 = vmax.f32 %v601, %v602
    %v604 = vrot.slane %v603, 1
    %v605 = vmax.f32 %v603, %v604
    %v606 = vsub.f32 %v595, %v605
    %v607 = vmul.f32 %v606, 1.442695
    %v608 = vpow.pop %v607
    %v609 = vsel %vm598, %v608, 0.0
    %v610 = vrot.slane %v609, 4
    %v611 = vadd.f32 %v609, %v610
    %v612 = vrot.slane %v611, 2
    %v613 = vadd.f32 %v611, %v612
    %v614 = vrot.slane %v613, 1
    %v615 = vadd.f32 %v613, %v614
    %v616 = vrcp.pop %v615
    %v617 = vmul.f32 %v608, %v616
    %618 = vxpose.xlu0.b32.start [1/16] %v617, 128
    %619 = vxpose.xlu0.b32.cont [2/16] 0.0, 128
    %620 = vxpose.xlu0.b32.cont [3/16] 0.0, 128
    %621 = vxpose.xlu0.b32.cont [4/16] 0.0, 128
    %622 = vxpose.xlu0.b32.cont [5/16] 0.0, 128
    %623 = vxpose.xlu0.b32.cont [6/16] 0.0, 128
    %624 = vxpose.xlu0.b32.cont [7/16] 0.0, 128
    %625 = vxpose.xlu0.b32.cont [8/16] 0.0, 128
    %626 = vxpose.xlu0.b32.cont [9/16] 0.0, 128
    %627 = vxpose.xlu0.b32.cont [10/16] 0.0, 128
    %628 = vxpose.xlu0.b32.cont [11/16] 0.0, 128
    %629 = vxpose.xlu0.b32.cont [12/16] 0.0, 128
    %630 = vxpose.xlu0.b32.cont [13/16] 0.0, 128
    %631 = vxpose.xlu0.b32.cont [14/16] 0.0, 128
    %632 = vxpose.xlu0.b32.cont [15/16] 0.0, 128
    %633 = vxpose.xlu0.b32.end [16/16] 0.0, 128
    %v634 = vpop.trf.xlu0
    %v635 = vpop.trf.xlu0
    %v636 = vpop.trf.xlu0
    %v637 = vpop.trf.xlu0
    %v638 = vpop.trf.xlu0
    %v639 = vpop.trf.xlu0
    %v640 = vpop.trf.xlu0
    %v641 = vpop.trf.xlu0
    %v642 = vpop.trf.xlu0
    %v643 = vpop.trf.xlu0
    %v644 = vpop.trf.xlu0
    %v645 = vpop.trf.xlu0
    %v646 = vpop.trf.xlu0
    %v647 = vpop.trf.xlu0
    %v648 = vpop.trf.xlu0
    %v649 = vpop.trf.xlu0
    %vm650 = vcmask 31744
    %651 = vst.msk [vmem:[%s2] sm:$0xff] %vm650, %v634
    %652 = vst.msk [vmem:[%s2 + $0x8] sm:$0xff] %vm650, %v635
    %653 = vst.msk [vmem:[%s2 + $0x10] sm:$0xff] %vm650, %v636
    %654 = vst.msk [vmem:[%s2 + $0x18] sm:$0xff] %vm650, %v637
    %655 = vst.msk [vmem:[%s2 + $0x20] sm:$0xff] %vm650, %v638
    %656 = vst.msk [vmem:[%s2 + $0x28] sm:$0xff] %vm650, %v639
    %657 = vst.msk [vmem:[%s2 + $0x30] sm:$0xff] %vm650, %v640
    %658 = vst.msk [vmem:[%s2 + $0x38] sm:$0xff] %vm650, %v641
    %659 = vst.msk [vmem:[%s2 + $0x40] sm:$0xff] %vm650, %v642
    %660 = vst.msk [vmem:[%s2 + $0x48] sm:$0xff] %vm650, %v643
    %661 = vst.msk [vmem:[%s2 + $0x50] sm:$0xff] %vm650, %v644
    %662 = vst.msk [vmem:[%s2 + $0x58] sm:$0xff] %vm650, %v645
    %663 = vst.msk [vmem:[%s2 + $0x60] sm:$0xff] %vm650, %v646
    %664 = vst.msk [vmem:[%s2 + $0x68] sm:$0xff] %vm650, %v647
    %665 = vst.msk [vmem:[%s2 + $0x70] sm:$0xff] %vm650, %v648
    %666 = vst.msk [vmem:[%s2 + $0x78] sm:$0xff] %vm650, %v649
    // Predicated region
    $region14: #{tpu_custom_call.1} parent=1 // pred_check
      _
    $region15: #{tpu_custom_call.1} parent=1 // pred_check_branch
      %668 = sbr.rel (0) target = $region17
    $region16: #{tpu_custom_call.1} parent=1 // pred_region
      _
    $region17: #{tpu_custom_call.1} parent=1 // pred_fallthru
      _
    // Predicated region
    $region18: #{tpu_custom_call.1} parent=1 // pred_check
      _
    $region19: #{tpu_custom_call.1} parent=1 // pred_check_branch
      %670 = sbr.rel (0) target = $region21
    $region20: #{tpu_custom_call.1} parent=1 // pred_region
      _
    $region21: #{tpu_custom_call.1} parent=1 // pred_fallthru
      _
    %671 = vsyncpa [#allocation3], 1

</llo_original>
